<compile_context>
chip_gen: v7x
topology: tpu7x:2x2x1
jax: 0.10.0
libtpu: 0.0.40
codegen_flags: <defaults>
</compile_context>

<pallas_src>
import functools

import jax
import jax.numpy as jnp
from jax.experimental import pallas as pl
from jax.experimental.pallas import tpu as pltpu


_EPS = 1e-07


def _round_up(x, m):
    return ((x + m - 1) // m) * m


def _block_diag(block, g):
    """Replicate `block` g times along the diagonal (zeros elsewhere)."""
    r, c = block.shape
    out = jnp.zeros((g * r, g * c), block.dtype)
    for i in range(g):
        out = out.at[i * r:(i + 1) * r, i * c:(i + 1) * c].set(block)
    return out


def actor_kernel(x_ref, w1_ref, b1_ref, wh_ref, bh_ref, out_ref, *,
                 group_out, n_actions):
    # x: (TBP, G*E) — G batch rows packed per 128-lane row.
    x = x_ref[...]
    # Hidden layer (block-diagonal => 4 independent Linear(E,64)+ReLU).
    h = jnp.dot(x, w1_ref[...], preferred_element_type=jnp.float32)       # (TBP, G*Hg)
    h = jnp.maximum(h + b1_ref[...], 0.0)

    # Fused heads: per group the 2A columns are [mean | var_pre].
    y = jnp.dot(h, wh_ref[...], preferred_element_type=jnp.float32) + bh_ref[...]  # (TBP, G*2A)

    # Numerically-stable softplus (+ eps) for the var/scale columns.
    sp = jnp.maximum(y, 0.0) + jnp.log1p(jnp.exp(-jnp.abs(y))) + _EPS

    # Group-local column index: [0, A) -> mean (identity), [A, 2A) -> scale.
    col = jax.lax.broadcasted_iota(jnp.int32, y.shape, 1)
    is_mean = (col % group_out) < n_actions
    out_ref[...] = jnp.where(is_mean, y, sp).astype(out_ref.dtype)


def init_params(key, embedding_size, n_actions, hidden=40):
    """Deterministic init mimicking PyTorch nn.Linear (uniform +/- 1/sqrt(fan_in)).
    Weights stored as [in, out]; biases as [1, out]."""
    def linear(k, fan_in, fan_out):
        kw, kb = jax.random.split(k)
        bound = 1.0 / jnp.sqrt(fan_in)
        w = jax.random.uniform(kw, (fan_in, fan_out), jnp.float32, -bound, bound)
        b = jax.random.uniform(kb, (1, fan_out), jnp.float32, -bound, bound)
        return w, b

    k1, k2, k3 = jax.random.split(key, 3)
    w_actor, b_actor = linear(k1, embedding_size, hidden)
    w_mean, b_mean = linear(k2, hidden, n_actions)
    w_var, b_var = linear(k3, hidden, n_actions)
    return dict(w_actor=w_actor, b_actor=b_actor,
                w_mean=w_mean, b_mean=b_mean,
                w_var=w_var, b_var=b_var)


def pack_params(params, group=4, hidden_group=64):
    """Lane-dense packing of the parameters.

    * hidden 40 -> hidden_group (zero pad; exact: ReLU(0+0)=0, zero weight
      rows contribute 0).
    * mean/var heads fused into one [Hg, 2A] matrix per group.
    * block-diagonal replication across `group` packed batch rows so that
      a (.., G*E) @ (G*E, G*Hg) matmul computes G independent rows exactly.
    """
    w_actor = params["w_actor"]          # (E, H)
    b_actor = params["b_actor"]          # (1, H)
    E, H = w_actor.shape
    A = params["w_mean"].shape[1]
    Hg = max(int(hidden_group), _round_up(H, 8))
    G = int(group)

    # Per-group padded hidden layer.
    w1g = jnp.zeros((E, Hg), jnp.float32).at[:, :H].set(w_actor)
    b1g = jnp.zeros((1, Hg), jnp.float32).at[:, :H].set(b_actor)

    # Per-group fused heads: columns [0,A) = mean, [A,2A) = var_pre.
    whg = jnp.zeros((Hg, 2 * A), jnp.float32)
    whg = whg.at[:H, :A].set(params["w_mean"])
    whg = whg.at[:H, A:].set(params["w_var"])
    bhg = jnp.concatenate([params["b_mean"], params["b_var"]], axis=1)  # (1, 2A)

    w1 = _block_diag(w1g, G)                 # (G*E, G*Hg)
    wh = _block_diag(whg, G)                 # (G*Hg, G*2A)
    b1 = jnp.tile(b1g, (1, G))               # (1, G*Hg)
    bh = jnp.tile(bhg, (1, G))               # (1, G*2A)

    return dict(w1=w1, b1=b1, w_heads=wh, b_heads=bh,
                group=G, n_actions=A, embedding_size=E)


def _choose_tile(batch, tile_b, row_align):
    """Batch tile (in original rows): multiple of row_align, capped at
    tile_b, and capped so the grid has >= 2 steps when the batch spans at
    least two aligned tiles (megacore on v7x)."""
    b_pad = _round_up(batch, row_align)
    tb = min(_round_up(int(tile_b), row_align), b_pad)
    if b_pad >= 2 * row_align:
        tb = min(tb, _round_up(pl.cdiv(b_pad, 2), row_align))
    return max(tb, row_align)


def continuous_actor_forward(embedding, packed, *, tile_b=8192):
    """Returns (mean, scale) of the Normal distribution produced by the module."""
    B, E = embedding.shape
    G = packed["group"]
    A = packed["n_actions"]
    two_a = 2 * A
    GE, GH = packed["w1"].shape          # (G*E, G*Hg)
    G2A = packed["w_heads"].shape[1]     # G*2A
    assert GE == G * E and G2A == G * two_a

    # Tile selection: tb rows of the original batch == tb//G packed rows.
    row_align = 8 * G                    # packed sublane alignment
    tb = _choose_tile(B, tile_b, row_align)
    Bp = _round_up(B, tb)
    if Bp != B:
        embedding = jnp.pad(embedding, ((0, Bp - B), (0, 0)))

    # FREE row-major reshape: pack G consecutive batch rows per 128-lane row.
    x_packed = embedding.reshape(Bp // G, GE)
    tbp = tb // G
    grid = (Bp // tb,)

    # Advisory cost estimate (actual packed-matmul flops / HBM bytes).
    flops = int(2 * (Bp // G) * (GE * GH + GH * G2A))
    transcendentals = int(2 * Bp * two_a)                 # exp + log1p per output elem
    bytes_accessed = int(4 * (Bp * (E + two_a)
                              + GE * GH + GH + GH * G2A + G2A))

    kernel = functools.partial(actor_kernel, group_out=two_a, n_actions=A)

    out = pl.pallas_call(
        kernel,
        out_shape=jax.ShapeDtypeStruct((Bp // G, G2A), jnp.float32),
        grid=grid,
        in_specs=[
            pl.BlockSpec((tbp, GE), lambda i: (i, 0)),     # batch-tiled packed input
            pl.BlockSpec((GE, GH), lambda i: (0, 0)),      # resident block-diag hidden W
            pl.BlockSpec((1, GH), lambda i: (0, 0)),       # resident hidden bias
            pl.BlockSpec((GH, G2A), lambda i: (0, 0)),     # resident block-diag head W
            pl.BlockSpec((1, G2A), lambda i: (0, 0)),      # resident head bias
        ],
        out_specs=pl.BlockSpec((tbp, G2A), lambda i: (i, 0)),
        compiler_params=pltpu.CompilerParams(
            dimension_semantics=("parallel",),
            vmem_limit_bytes=32 * 1024 * 1024,
        ),
        cost_estimate=pl.CostEstimate(
            flops=flops,
            transcendentals=transcendentals,
            bytes_accessed=bytes_accessed,
        ),
    )(x_packed, packed["w1"], packed["b1"], packed["w_heads"], packed["b_heads"])

    # FREE row-major unpack: (Bp/G, G*2A) -> (Bp, 2A); row i is batch row i.
    out = out.reshape(Bp, two_a)[:B]
    return out[:, :A], out[:, A:]


def _reference(embedding, params):
    h = jnp.maximum(embedding @ params["w_actor"] + params["b_actor"], 0.0)
    mean = h @ params["w_mean"] + params["b_mean"]
    scale = jax.nn.softplus(h @ params["w_var"] + params["b_var"]) + _EPS
    return mean, scale


if __name__ == "__main__":
    embedding_size = 32
    n_actions = 4

    key = jax.random.PRNGKey(0)
    k_x, k_p, k_x2 = jax.random.split(key, 3)
    params = init_params(k_p, embedding_size, n_actions)
    packed = pack_params(params)

    # Small single-tile case (batch=8; padded to one 32-row / 8-packed-row tile).
    embedding = jax.random.normal(k_x, (8, embedding_size), jnp.float32)
    mean, scale = continuous_actor_forward(embedding, packed)
    jax.block_until_ready((mean, scale))
    ref_mean, ref_scale = _reference(embedding, params)
    assert mean.shape == (8, n_actions) and scale.shape == (8, n_actions)
    assert jnp.allclose(mean, ref_mean, atol=1e-5, rtol=1e-5)
    assert jnp.allclose(scale, ref_scale, atol=1e-5, rtol=1e-5)
    assert bool(jnp.all(scale > 0.0))

    # Multi-tile + batch-padding path (B not a multiple of tile or group).
    embedding2 = jax.random.normal(k_x2, (300, embedding_size), jnp.float32)
    mean2, scale2 = continuous_actor_forward(embedding2, packed, tile_b=64)
    jax.block_until_ready((mean2, scale2))
    ref_mean2, ref_scale2 = _reference(embedding2, params)
    assert jnp.allclose(mean2, ref_mean2, atol=1e-5, rtol=1e-5)
    assert jnp.allclose(scale2, ref_scale2, atol=1e-5, rtol=1e-5)
    assert bool(jnp.all(scale2 > 0.0))

    # TODO(synk): torch.distributions.Normal object has no tensor compute; we
    # return its (mean, scale) parameters instead of a distribution object.
    print("KERNEL_OK")
</pallas_src>

<mosaic_0001>
module attributes {stable_mosaic.version = 11 : i64} {
  func.func @actor_kernel(%arg0: i32, %arg1: memref<8x128xf32, #tpu.memory_space<vmem>>, %arg2: memref<128x256xf32, #tpu.memory_space<vmem>>, %arg3: memref<1x256xf32, #tpu.memory_space<vmem>>, %arg4: memref<256x32xf32, #tpu.memory_space<vmem>>, %arg5: memref<1x32xf32, #tpu.memory_space<vmem>>, %arg6: memref<8x32xf32, #tpu.memory_space<vmem>>) attributes {dimension_semantics = [#tpu.dimension_semantics<parallel>], iteration_bounds = array<i64: 1>, scalar_prefetch = 0 : i64, scratch_operands = 0 : i64, tpu.core_type = #tpu.core_type<tc>, window_params = [{transform_indices = @transform_0, window_bounds = array<i64: 8, 128>}, {pipeline_mode = #tpu.pipeline_mode<synchronous>, transform_indices = @transform_1, window_bounds = array<i64: 128, 256>}, {pipeline_mode = #tpu.pipeline_mode<synchronous>, transform_indices = @transform_2, window_bounds = array<i64: 1, 256>}, {pipeline_mode = #tpu.pipeline_mode<synchronous>, transform_indices = @transform_3, window_bounds = array<i64: 256, 32>}, {pipeline_mode = #tpu.pipeline_mode<synchronous>, transform_indices = @transform_4, window_bounds = array<i64: 1, 32>}, {transform_indices = @transform_5, window_bounds = array<i64: 8, 32>}]} {
    %c0 = arith.constant 0 : index
    %c0_0 = arith.constant 0 : index
    %0 = vector.load %arg1[%c0, %c0_0] : memref<8x128xf32, #tpu.memory_space<vmem>>, vector<8x128xf32>
    %c0_1 = arith.constant 0 : index
    %c0_2 = arith.constant 0 : index
    %1 = vector.load %arg2[%c0_1, %c0_2] : memref<128x256xf32, #tpu.memory_space<vmem>>, vector<128x256xf32>
    %cst = arith.constant dense<0.000000e+00> : vector<8x256xf32>
    %2 = tpu.matmul %0, %1, %cst {dimension_numbers = #tpu.dot_dimension_numbers<[1], [0], [0], [1], [0, 0, 1, 1], [], []>} : vector<8x128xf32>, vector<128x256xf32>, vector<8x256xf32> -> vector<8x256xf32>
    %c0_3 = arith.constant 0 : index
    %c0_4 = arith.constant 0 : index
    %3 = vector.load %arg3[%c0_3, %c0_4] : memref<1x256xf32, #tpu.memory_space<vmem>>, vector<1x256xf32>
    %4 = vector.broadcast %3 : vector<1x256xf32> to vector<8x256xf32>
    %5 = arith.addf %2, %4 : vector<8x256xf32>
    %cst_5 = arith.constant 0.000000e+00 : f32
    %6 = vector.broadcast %cst_5 : f32 to vector<8x256xf32>
    %7 = arith.maximumf %5, %6 : vector<8x256xf32>
    %c0_6 = arith.constant 0 : index
    %c0_7 = arith.constant 0 : index
    %8 = vector.load %arg4[%c0_6, %c0_7] : memref<256x32xf32, #tpu.memory_space<vmem>>, vector<256x32xf32>
    %cst_8 = arith.constant dense<0.000000e+00> : vector<8x32xf32>
    %9 = tpu.matmul %7, %8, %cst_8 {dimension_numbers = #tpu.dot_dimension_numbers<[1], [0], [0], [1], [0, 0, 1, 1], [], []>} : vector<8x256xf32>, vector<256x32xf32>, vector<8x32xf32> -> vector<8x32xf32>
    %c0_9 = arith.constant 0 : index
    %c0_10 = arith.constant 0 : index
    %10 = vector.load %arg5[%c0_9, %c0_10] : memref<1x32xf32, #tpu.memory_space<vmem>>, vector<1x32xf32>
    %11 = vector.broadcast %10 : vector<1x32xf32> to vector<8x32xf32>
    %12 = arith.addf %9, %11 : vector<8x32xf32>
    %cst_11 = arith.constant 0.000000e+00 : f32
    %13 = vector.broadcast %cst_11 : f32 to vector<8x32xf32>
    %14 = arith.maximumf %12, %13 : vector<8x32xf32>
    %15 = math.absf %12 : vector<8x32xf32>
    %cst_12 = arith.constant 0.000000e+00 : f32
    %16 = vector.broadcast %cst_12 : f32 to vector<8x32xf32>
    %17 = arith.subf %16, %15 : vector<8x32xf32>
    %18 = math.exp %17 : vector<8x32xf32>
    %19 = math.log1p %18 : vector<8x32xf32>
    %20 = arith.addf %14, %19 : vector<8x32xf32>
    %cst_13 = arith.constant 1.000000e-07 : f32
    %21 = vector.broadcast %cst_13 : f32 to vector<8x32xf32>
    %22 = arith.addf %20, %21 : vector<8x32xf32>
    %23 = tpu.iota {dimensions = array<i32: 1>} : vector<8x32xi32>
    %c8_i32 = arith.constant 8 : i32
    %c0_i32 = arith.constant 0 : i32
    %24 = arith.cmpi eq, %c8_i32, %c0_i32 : i32
    %c1_i32 = arith.constant 1 : i32
    %25 = arith.select %24, %c1_i32, %c8_i32 : i32
    %26 = vector.broadcast %25 : i32 to vector<8x32xi32>
    %27 = arith.remsi %23, %26 : vector<8x32xi32>
    %c0_i32_14 = arith.constant 0 : i32
    %28 = vector.broadcast %c0_i32_14 : i32 to vector<8x32xi32>
    %29 = arith.cmpi ne, %27, %28 : vector<8x32xi32>
    %c0_i32_15 = arith.constant 0 : i32
    %30 = vector.broadcast %c0_i32_15 : i32 to vector<8x32xi32>
    %31 = arith.cmpi slt, %27, %30 : vector<8x32xi32>
    %c0_i32_16 = arith.constant 0 : i32
    %32 = arith.cmpi slt, %25, %c0_i32_16 : i32
    %33 = vector.broadcast %32 : i1 to vector<8x32xi1>
    %34 = vector.broadcast %33 : vector<8x32xi1> to vector<8x32xi1>
    %35 = arith.xori %31, %34 : vector<8x32xi1>
    %36 = arith.andi %35, %29 : vector<8x32xi1>
    %37 = vector.broadcast %25 : i32 to vector<8x32xi32>
    %38 = arith.addi %27, %37 : vector<8x32xi32>
    %39 = arith.select %36, %38, %27 : vector<8x32xi1>, vector<8x32xi32>
    %c4_i32 = arith.constant 4 : i32
    %40 = vector.broadcast %c4_i32 : i32 to vector<8x32xi32>
    %41 = arith.cmpi slt, %39, %40 : vector<8x32xi32>
    %42 = arith.select %41, %12, %22 : vector<8x32xi1>, vector<8x32xf32>
    %c0_17 = arith.constant 0 : index
    %c0_18 = arith.constant 0 : index
    %43 = vector.load %arg6[%c0_17, %c0_18] : memref<8x32xf32, #tpu.memory_space<vmem>>, vector<8x32xf32>
    tpu.vector_store %arg6[%c0_17, %c0_18], %42 {strides = array<i32>} : memref<8x32xf32, #tpu.memory_space<vmem>>, vector<8x32xf32>,
    return
  }
  func.func @transform_0(%arg0: i32) -> (i32, i32) {
    %c0_i32 = arith.constant 0 : i32
    %c0_i32_0 = arith.constant 0 : i32
    return %arg0, %c0_i32 : i32, i32
  }
  func.func @transform_1(%arg0: i32) -> (i32, i32) {
    %c0_i32 = arith.constant 0 : i32
    %c0_i32_0 = arith.constant 0 : i32
    %c0_i32_1 = arith.constant 0 : i32
    return %c0_i32, %c0_i32_0 : i32, i32
  }
  func.func @transform_2(%arg0: i32) -> (i32, i32) {
    %c0_i32 = arith.constant 0 : i32
    %c0_i32_0 = arith.constant 0 : i32
    %c0_i32_1 = arith.constant 0 : i32
    return %c0_i32, %c0_i32_0 : i32, i32
  }
  func.func @transform_3(%arg0: i32) -> (i32, i32) {
    %c0_i32 = arith.constant 0 : i32
    %c0_i32_0 = arith.constant 0 : i32
    %c0_i32_1 = arith.constant 0 : i32
    return %c0_i32, %c0_i32_0 : i32, i32
  }
  func.func @transform_4(%arg0: i32) -> (i32, i32) {
    %c0_i32 = arith.constant 0 : i32
    %c0_i32_0 = arith.constant 0 : i32
    %c0_i32_1 = arith.constant 0 : i32
    return %c0_i32, %c0_i32_0 : i32, i32
  }
  func.func @transform_5(%arg0: i32) -> (i32, i32) {
    %c0_i32 = arith.constant 0 : i32
    %c0_i32_0 = arith.constant 0 : i32
    return %arg0, %c0_i32 : i32, i32
  }
}

</mosaic_0001>

<llo_original>
// kernel: tpu_custom_call.1
$region0: #{tpu_custom_call.1}
  #allocation0 [shape = 'u32[]', space=smem, size = 0x4, offset = 0x4, fixed_abs, tag = 'smem constant byte address 0x4 - core index']
  #allocation1 [shape = 'u32[144,128]{1,0:T(1,128)}', space=vmem, size = 0x12000, scoped, tag = 'internal scratch']
  %s0 = inlined_call_operand.vmem [shape: f32[8,128], index: 0, kind: input, shape index: {}]
  %s1 = inlined_call_operand.vmem [shape: f32[128,256], index: 1, kind: input, shape index: {}]
  %s2 = inlined_call_operand.vmem [shape: f32[1,256], index: 2, kind: input, shape index: {}]
  %s3 = inlined_call_operand.vmem [shape: f32[256,32], index: 3, kind: input, shape index: {}]
  %s4 = inlined_call_operand.vmem [shape: f32[1,32], index: 4, kind: input, shape index: {}]
  %s5 = inlined_call_operand.hbm [shape: f32[8,32], index: 5, kind: output, shape index: {}]
  %s6 = sld [smem:[#allocation0]]
  $region30: #{tpu_custom_call.1} parent=0
    _
  %s8 = ssub.s32 1, %s6
  %s9 = scalar_select 0, %s8, %s6
  $region1: #{tpu_custom_call.1} parent=0
    #allocation2 [shape = 'u8[4096]{0}', space=vmem, size = 0x1000, scoped, tag = 'output window, operand 0, single buffered']
    #allocation3 [shape = 's32[1]{0}', space=sflag, size = 0x4, scoped, tag = 'scoped memory for tpu_custom_call.1']
    %10 = vsyncpa [#allocation3], 0
    // Predicated region
    $region2: #{tpu_custom_call.1} parent=1 // pred_check
      _
    $region3: #{tpu_custom_call.1} parent=1 // pred_check_branch
      %12 = sbr.rel (0) target = $region5
    $region4: #{tpu_custom_call.1} parent=1 // pred_region
      _
    $region5: #{tpu_custom_call.1} parent=1 // pred_fallthru
      _
    // Predicated region
    $region6: #{tpu_custom_call.1} parent=1 // pred_check
      _
    $region7: #{tpu_custom_call.1} parent=1 // pred_check_branch
      %14 = sbr.rel (0) target = $region9
    $region8: #{tpu_custom_call.1} parent=1 // pred_region
      _
    $region9: #{tpu_custom_call.1} parent=1 // pred_fallthru
      _
    // Predicated region
    $region10: #{tpu_custom_call.1} parent=1 // pred_check
      _
    $region11: #{tpu_custom_call.1} parent=1 // pred_check_branch
      %16 = sbr.rel (0) target = $region13
    $region12: #{tpu_custom_call.1} parent=1 // pred_region
      _
    $region13: #{tpu_custom_call.1} parent=1 // pred_fallthru
      _
    // Predicated region
    $region14: #{tpu_custom_call.1} parent=1 // pred_check
      _
    $region15: #{tpu_custom_call.1} parent=1 // pred_check_branch
      %18 = sbr.rel (0) target = $region17
    $region16: #{tpu_custom_call.1} parent=1 // pred_region
      _
    $region17: #{tpu_custom_call.1} parent=1 // pred_fallthru
      _
    // Predicated region
    $region18: #{tpu_custom_call.1} parent=1 // pred_check
      _
    $region19: #{tpu_custom_call.1} parent=1 // pred_check_branch
      %20 = sbr.rel (0) target = $region21
    $region20: #{tpu_custom_call.1} parent=1 // pred_region
      _
    $region21: #{tpu_custom_call.1} parent=1 // pred_fallthru
      _
    %v21 = vld [vmem:[%s0] sm:$0xff]
    %v22 = vld [vmem:[%s1] sm:$0xff]
    %v23 = vld [vmem:[%s1 + $0x8] sm:$0xff]
    %v24 = vld [vmem:[%s1 + $0x10] sm:$0xff]
    %v25 = vld [vmem:[%s1 + $0x18] sm:$0xff]
    %v26 = vld [vmem:[%s1 + $0x20] sm:$0xff]
    %v27 = vld [vmem:[%s1 + $0x28] sm:$0xff]
    %v28 = vld [vmem:[%s1 + $0x30] sm:$0xff]
    %v29 = vld [vmem:[%s1 + $0x38] sm:$0xff]
    %v30 = vld [vmem:[%s1 + $0x40] sm:$0xff]
    %v31 = vld [vmem:[%s1 + $0x48] sm:$0xff]
    %v32 = vld [vmem:[%s1 + $0x50] sm:$0xff]
    %v33 = vld [vmem:[%s1 + $0x58] sm:$0xff]
    %v34 = vld [vmem:[%s1 + $0x60] sm:$0xff]
    %v35 = vld [vmem:[%s1 + $0x68] sm:$0xff]
    %v36 = vld [vmem:[%s1 + $0x70] sm:$0xff]
    %v37 = vld [vmem:[%s1 + $0x78] sm:$0xff]
    %v38 = vld [vmem:[%s1 + $0x80] sm:$0xff]
    %v39 = vld [vmem:[%s1 + $0x88] sm:$0xff]
    %v40 = vld [vmem:[%s1 + $0x90] sm:$0xff]
    %v41 = vld [vmem:[%s1 + $0x98] sm:$0xff]
    %v42 = vld [vmem:[%s1 + $0xa0] sm:$0xff]
    %v43 = vld [vmem:[%s1 + $0xa8] sm:$0xff]
    %v44 = vld [vmem:[%s1 + $0xb0] sm:$0xff]
    %v45 = vld [vmem:[%s1 + $0xb8] sm:$0xff]
    %v46 = vld [vmem:[%s1 + $0xc0] sm:$0xff]
    %v47 = vld [vmem:[%s1 + $0xc8] sm:$0xff]
    %v48 = vld [vmem:[%s1 + $0xd0] sm:$0xff]
    %v49 = vld [vmem:[%s1 + $0xd8] sm:$0xff]
    %v50 = vld [vmem:[%s1 + $0xe0] sm:$0xff]
    %v51 = vld [vmem:[%s1 + $0xe8] sm:$0xff]
    %v52 = vld [vmem:[%s1 + $0xf0] sm:$0xff]
    %v53 = vld [vmem:[%s1 + $0xf8] sm:$0xff]
    %v54 = vld [vmem:[%s2] sm:$0x3]
    %v56 = vlaneseq
    %v57 = vshrl.u32 %v56, 7
    %v58 = vsub.s32 0, %v57
    %v59 = vrot.slane %v54, %v58
    %v60 = vlaneseq
    %v61 = vshrl.u32 %v60, 7
    %v62 = vsub.s32 1, %v61
    %v63 = vrot.slane %v54, %v62
    %66 = vmatprep.subr.mxu0 %v23
    %67 = vmatpush1.msra.mxu0 %v22
    %68 = vmatprep.subr.mxu0 %v25
    %69 = vmatpush1.msra.mxu0 %v24
    %70 = vmatprep.subr.mxu0 %v27
    %71 = vmatpush1.msra.mxu0 %v26
    %72 = vmatprep.subr.mxu0 %v29
    %73 = vmatpush1.msra.mxu0 %v28
    %74 = vmatprep.subr.mxu0 %v31
    %75 = vmatpush1.msra.mxu0 %v30
    %76 = vmatprep.subr.mxu0 %v33
    %77 = vmatpush1.msra.mxu0 %v32
    %78 = vmatprep.subr.mxu0 %v35
    %79 = vmatpush1.msra.mxu0 %v34
    %80 = vmatprep.subr.mxu0 %v37
    %81 = vmatpush1.msra.mxu0 %v36
    %82 = vmatprep.subr.mxu0 %v39
    %83 = vmatpush1.msra.mxu0 %v38
    %84 = vmatprep.subr.mxu0 %v41
    %85 = vmatpush1.msra.mxu0 %v40
    %86 = vmatprep.subr.mxu0 %v43
    %87 = vmatpush1.msra.mxu0 %v42
    %88 = vmatprep.subr.mxu0 %v45
    %89 = vmatpush1.msra.mxu0 %v44
    %90 = vmatprep.subr.mxu0 %v47
    %91 = vmatpush1.msra.mxu0 %v46
    %92 = vmatprep.subr.mxu0 %v49
    %93 = vmatpush1.msra.mxu0 %v48
    %94 = vmatprep.subr.mxu0 %v51
    %95 = vmatpush1.msra.mxu0 %v50
    %96 = vmatprep.subr.mxu0 %v53
    %97 = vmatpush1.msra.mxu0 %v52
    %98 = vmatprep.subr.mxu0 0.0
    %99 = vmatpush1.msra.mxu0 0.0
    %100 = vmatprep.subr.mxu0 0.0
    %101 = vmatpush1.msra.mxu0 0.0
    %102 = vmatprep.subr.mxu0 0.0
    %103 = vmatpush1.msra.mxu0 0.0
    %104 = vmatprep.subr.mxu0 0.0
    %105 = vmatpush1.msra.mxu0 0.0
    %106 = vmatprep.subr.mxu0 0.0
    %107 = vmatpush1.msra.mxu0 0.0
    %108 = vmatprep.subr.mxu0 0.0
    %109 = vmatpush1.msra.mxu0 0.0
    %110 = vmatprep.subr.mxu0 0.0
    %111 = vmatpush1.msra.mxu0 0.0
    %112 = vmatprep.subr.mxu0 0.0
    %113 = vmatpush1.msra.mxu0 0.0
    %114 = vmatprep.subr.mxu0 0.0
    %115 = vmatpush1.msra.mxu0 0.0
    %116 = vmatprep.subr.mxu0 0.0
    %117 = vmatpush1.msra.mxu0 0.0
    %118 = vmatprep.subr.mxu0 0.0
    %119 = vmatpush1.msra.mxu0 0.0
    %120 = vmatprep.subr.mxu0 0.0
    %121 = vmatpush1.msra.mxu0 0.0
    %122 = vmatprep.subr.mxu0 0.0
    %123 = vmatpush1.msra.mxu0 0.0
    %124 = vmatprep.subr.mxu0 0.0
    %125 = vmatpush1.msra.mxu0 0.0
    %126 = vmatprep.subr.mxu0 0.0
    %127 = vmatpush1.msra.mxu0 0.0
    %128 = vmatprep.subr.mxu0 0.0
    %129 = vmatpush1.msra.mxu0 0.0
    %130 = vmatprep.mubr.f32.mxu0 0.0
    %131 = vmatmul.mubr.f32.gmra.mrb[0].mxu0 %v21
    %v132 = vpop.f32.mrb[0].mxu0
    %v133 = vadd.f32 %v59, %v132
    %v134 = vpop.f32.mrb[0].mxu0
    %v135 = vadd.f32 %v63, %v134
    %136 = vdwg.mxu0
    %v137 = vmax.f32 %v133, 0.0
    %v138 = vmax.f32 %v135, 0.0
    %v139 = vld [vmem:[%s3] sm:$0xff]
    %v140 = vld [vmem:[%s3 + $0x8] sm:$0xff]
    %v141 = vld [vmem:[%s3 + $0x10] sm:$0xff]
    %v142 = vld [vmem:[%s3 + $0x18] sm:$0xff]
    %v143 = vld [vmem:[%s3 + $0x20] sm:$0xff]
    %v144 = vld [vmem:[%s3 + $0x28] sm:$0xff]
    %v145 = vld [vmem:[%s3 + $0x30] sm:$0xff]
    %v146 = vld [vmem:[%s3 + $0x38] sm:$0xff]
    %v147 = vld [vmem:[%s3 + $0x40] sm:$0xff]
    %v148 = vld [vmem:[%s3 + $0x48] sm:$0xff]
    %v149 = vld [vmem:[%s3 + $0x50] sm:$0xff]
    %v150 = vld [vmem:[%s3 + $0x58] sm:$0xff]
    %v151 = vld [vmem:[%s3 + $0x60] sm:$0xff]
    %v152 = vld [vmem:[%s3 + $0x68] sm:$0xff]
    %v153 = vld [vmem:[%s3 + $0x70] sm:$0xff]
    %v154 = vld [vmem:[%s3 + $0x78] sm:$0xff]
    %v155 = vld [vmem:[%s3 + $0x80] sm:$0xff]
    %v156 = vld [vmem:[%s3 + $0x88] sm:$0xff]
    %v157 = vld [vmem:[%s3 + $0x90] sm:$0xff]
    %v158 = vld [vmem:[%s3 + $0x98] sm:$0xff]
    %v159 = vld [vmem:[%s3 + $0xa0] sm:$0xff]
    %v160 = vld [vmem:[%s3 + $0xa8] sm:$0xff]
    %v161 = vld [vmem:[%s3 + $0xb0] sm:$0xff]
    %v162 = vld [vmem:[%s3 + $0xb8] sm:$0xff]
    %v163 = vld [vmem:[%s3 + $0xc0] sm:$0xff]
    %v164 = vld [vmem:[%s3 + $0xc8] sm:$0xff]
    %v165 = vld [vmem:[%s3 + $0xd0] sm:$0xff]
    %v166 = vld [vmem:[%s3 + $0xd8] sm:$0xff]
    %v167 = vld [vmem:[%s3 + $0xe0] sm:$0xff]
    %v168 = vld [vmem:[%s3 + $0xe8] sm:$0xff]
    %v169 = vld [vmem:[%s3 + $0xf0] sm:$0xff]
    %v170 = vld [vmem:[%s3 + $0xf8] sm:$0xff]
    %v171 = vld [vmem:[%s4] sm:$0x1]
    %v173 = vlaneseq
    %v174 = vshrl.u32 %v173, 7
    %v175 = vsub.s32 0, %v174
    %v176 = vrot.slane %v171, %v175
    %178 = vmatprep.subr.mxu0 0.0
    %179 = vmatpush1.msra.mxu0 %v139
    %180 = vmatprep.subr.mxu0 0.0
    %181 = vmatpush1.msra.mxu0 %v140
    %182 = vmatprep.subr.mxu0 0.0
    %183 = vmatpush1.msra.mxu0 %v141
    %184 = vmatprep.subr.mxu0 0.0
    %185 = vmatpush1.msra.mxu0 %v142
    %186 = vmatprep.subr.mxu0 0.0
    %187 = vmatpush1.msra.mxu0 %v143
    %188 = vmatprep.subr.mxu0 0.0
    %189 = vmatpush1.msra.mxu0 %v144
    %190 = vmatprep.subr.mxu0 0.0
    %191 = vmatpush1.msra.mxu0 %v145
    %192 = vmatprep.subr.mxu0 0.0
    %193 = vmatpush1.msra.mxu0 %v146
    %194 = vmatprep.subr.mxu0 0.0
    %195 = vmatpush1.msra.mxu0 %v147
    %196 = vmatprep.subr.mxu0 0.0
    %197 = vmatpush1.msra.mxu0 %v148
    %198 = vmatprep.subr.mxu0 0.0
    %199 = vmatpush1.msra.mxu0 %v149
    %200 = vmatprep.subr.mxu0 0.0
    %201 = vmatpush1.msra.mxu0 %v150
    %202 = vmatprep.subr.mxu0 0.0
    %203 = vmatpush1.msra.mxu0 %v151
    %204 = vmatprep.subr.mxu0 0.0
    %205 = vmatpush1.msra.mxu0 %v152
    %206 = vmatprep.subr.mxu0 0.0
    %207 = vmatpush1.msra.mxu0 %v153
    %208 = vmatprep.subr.mxu0 0.0
    %209 = vmatpush1.msra.mxu0 %v154
    %210 = vmatprep.subr.mxu0 0.0
    %211 = vmatpush1.msra.mxu0 %v155
    %212 = vmatprep.subr.mxu0 0.0
    %213 = vmatpush1.msra.mxu0 %v156
    %214 = vmatprep.subr.mxu0 0.0
    %215 = vmatpush1.msra.mxu0 %v157
    %216 = vmatprep.subr.mxu0 0.0
    %217 = vmatpush1.msra.mxu0 %v158
    %218 = vmatprep.subr.mxu0 0.0
    %219 = vmatpush1.msra.mxu0 %v159
    %220 = vmatprep.subr.mxu0 0.0
    %221 = vmatpush1.msra.mxu0 %v160
    %222 = vmatprep.subr.mxu0 0.0
    %223 = vmatpush1.msra.mxu0 %v161
    %224 = vmatprep.subr.mxu0 0.0
    %225 = vmatpush1.msra.mxu0 %v162
    %226 = vmatprep.subr.mxu0 0.0
    %227 = vmatpush1.msra.mxu0 %v163
    %228 = vmatprep.subr.mxu0 0.0
    %229 = vmatpush1.msra.mxu0 %v164
    %230 = vmatprep.subr.mxu0 0.0
    %231 = vmatpush1.msra.mxu0 %v165
    %232 = vmatprep.subr.mxu0 0.0
    %233 = vmatpush1.msra.mxu0 %v166
    %234 = vmatprep.subr.mxu0 0.0
    %235 = vmatpush1.msra.mxu0 %v167
    %236 = vmatprep.subr.mxu0 0.0
    %237 = vmatpush1.msra.mxu0 %v168
    %238 = vmatprep.subr.mxu0 0.0
    %239 = vmatpush1.msra.mxu0 %v169
    %240 = vmatprep.subr.mxu0 0.0
    %241 = vmatpush1.msra.mxu0 %v170
    %242 = vmatprep.mubr.f32.mxu0 %v138
    %243 = vmatmul.mubr.f32.gmra.mrb[0].mxu0 %v137
    %v244 = vpop.f32.mrb[0].mxu0
    %v245 = vadd.f32 %v176, %v244
    %v246 = vpop.f32.mrb[0].mxu0
    %247 = vdwg.mxu0
    %v248 = vmax.f32 %v245, 0.0
    %v249 = vand.u32 2147483647, %v245
    %v250 = vsub.f32 0.0, %v249
    %v251 = vmul.f32 %v250, 1.442695
    %v252 = vpow.pop %v251
    %v253 = vadd.f32 %v252, 1.0
    %v254 = vlog2.pop %v253
    %v255 = vmul.f32 %v254, 0.6931472
    %v256 = vmul.f32 -0.5, %v252
    %v257 = vadd.f32 %v256, 1.0
    %v258 = vmul.f32 %v257, %v252
    %v259 = vand.u32 2147483647, %v252
    %vm260 = vcmp.lt.f32.partialorder %v259, 0.0004427343
    %v261 = vsel %vm260, %v258, %v255
    %v262 = vadd.f32 %v248, %v261
    %v263 = vadd.f32 %v262, 1e-07
    %v264 = vlaneseq
    %v265 = vand.u32 %v264, 127
    %vm266 = vcmp.lt.s32.totalorder %v265, 0
    %v267 = vsub.s32 0, %v265
    %v268 = vsel %vm266, %v267, %v265
    %v269 = vshrl.u32 %v268, 3
    %v270 = vand.u32 %v268, 7
    %v271 = vsub.s32 0, %v270
    %v272 = vsel %vm266, %v271, %v270
    %vm273 = vcmp.ne.s32.totalorder %v272, 0
    %vm274 = vcmp.lt.s32.totalorder %v272, 0
    %vm275 = vmand %vm274, %vm273
    %v276 = vadd.s32 %v272, 8
    %v277 = vsel %vm275, %v276, %v272
    %vm278 = vcmp.lt.s32.totalorder %v277, 4
    %v279 = vsel %vm278, %v245, %v263
    %vm280 = vcmask 261120
    %281 = vst.msk [vmem:[#allocation2] sm:$0xff] %vm280, %v279
    // Predicated region
    $region22: #{tpu_custom_call.1} parent=1 // pred_check
      _
    $region23: #{tpu_custom_call.1} parent=1 // pred_check_branch
      %283 = sbr.rel (0) target = $region25
    $region24: #{tpu_custom_call.1} parent=1 // pred_region
      %s285 = ssub.s32 128, 128
      %286 = vsyncadd [#allocation3], %s285
      %s288 = sshll.u32 [#allocation2], 4
      %s289 = int_to_ptr.vmem [resolvable:$true] %s288
      %291 = dma.vmem_to_hbm [thread:$0]  %s289, 128, %s5, [#allocation3]
    $region25: #{tpu_custom_call.1} parent=1 // pred_fallthru
      _
    // Predicated region
    $region26: #{tpu_custom_call.1} parent=1 // pred_check
      _
    $region27: #{tpu_custom_call.1} parent=1 // pred_check_branch
      %293 = sbr.rel (0) target = $region29
    $region28: #{tpu_custom_call.1} parent=1 // pred_region
      %294 = dma.done [#allocation3], 128
    $region29: #{tpu_custom_call.1} parent=1 // pred_fallthru
      _
    %295 = vsyncpa [#allocation3], 1

</llo_original>
